<compile_context>
chip_gen: v7x
topology: tpu7x:2x2x1
jax: 0.10.0
libtpu: 0.0.40
codegen_flags: <defaults>
</compile_context>

<pallas_src>
import jax
import jax.numpy as jnp
from jax.experimental import pallas as pl
from jax.experimental.pallas import tpu as pltpu


def _color_jitter_kernel(factor_ref, img_ref, out_ref):
    # factor_ref : SMEM, shape (B,)       float32 — per-image brightness factor
    # img_ref    : VMEM, shape (C, TH, W) — one H-tile of one image
    # out_ref    : VMEM, shape (C, TH, W)
    f = factor_ref[pl.program_id(0)]                   # this image's factor
    img = img_ref[...].astype(jnp.float32)             # (C, TH, W)

    # brightness jitter; img >= 0 and f >= 0.5 so only the upper clamp matters
    jittered = jnp.minimum(img * f, jnp.float32(255.0))

    # background mask from channel 0 of the already-loaded tile (broadcast over C)
    is_back = img[0:1] == jnp.float32(255.0)            # (1, TH, W)

    out = jnp.where(is_back, jnp.float32(255.0), jittered)
    out_ref[...] = out.astype(out_ref.dtype)


def _choose_row_tile(H, C, W, itemsize, budget_bytes=2 * 1024 * 1024):
    """Largest 8-aligned divisor of H whose (C, TH, W) block fits the budget.
    Falls back to the full H (full-dim blocks are always layout-legal)."""
    if H % 8 != 0:
        return H
    bytes_per_row = max(1, C * W * itemsize)
    target = (budget_bytes // bytes_per_row) // 8 * 8
    th = min(max(8, target), H)
    th = (th // 8) * 8
    while th > 8 and H % th != 0:
        th -= 8
    return max(8, th)


def custom_color_jitter_batch(imgs, key, brightness=0.5):
    """Brightness-jitter a batch of (B, C, H, W) images in [0, 255], keeping
    pixels whose channel-0 value is exactly 255 white. One independent
    brightness factor per image (U[1-brightness, 1+brightness])."""
    B, C, H, W = imgs.shape
    lo = max(0.0, 1.0 - brightness)
    hi = 1.0 + brightness
    factors = jax.random.uniform(key, (B,), dtype=jnp.float32, minval=lo, maxval=hi)

    itemsize = jnp.dtype(imgs.dtype).itemsize
    TH = _choose_row_tile(H, C, W, itemsize)
    grid = (B, H // TH)

    # index_map receives (b, i, *prefetch_refs); returns block indices for the
    # (Squeezed batch, C, H-tile, W) block layout.
    def idx(b, i, factors_ref):
        return (b, 0, i, 0)

    out = pl.pallas_call(
        _color_jitter_kernel,
        out_shape=jax.ShapeDtypeStruct((B, C, H, W), imgs.dtype),
        grid_spec=pltpu.PrefetchScalarGridSpec(
            num_scalar_prefetch=1,
            grid=grid,
            in_specs=[pl.BlockSpec((pl.Squeezed(), C, TH, W), idx)],
            out_specs=pl.BlockSpec((pl.Squeezed(), C, TH, W), idx),
        ),
        compiler_params=pltpu.CompilerParams(
            dimension_semantics=("parallel", "parallel")),
    )(factors, imgs)

    return out


def custom_color_jitter(img, key, brightness=0.5):
    """Single-image (C, H, W) convenience wrapper (matches the PyTorch module)."""
    return custom_color_jitter_batch(img[None], key, brightness)[0]


def _reference(imgs, factors):
    """Plain-JAX reference with the exact same math."""
    imgs_f = imgs.astype(jnp.float32)
    jit = jnp.minimum(imgs_f * factors[:, None, None, None], 255.0)
    is_back = imgs_f[:, 0:1, :, :] == 255.0
    return jnp.where(is_back, 255.0, jit).astype(imgs.dtype)


if __name__ == "__main__":
    key = jax.random.PRNGKey(0)
    k_img, k_fac_b, k_fac_s = jax.random.split(key, 3)

    # ---- batched case: non-128-multiple W (no-pad full-width block path) ----
    B, C, H, W = 2, 3, 32, 224
    imgs = jax.random.uniform(k_img, (B, C, H, W), dtype=jnp.float32,
                              minval=0.0, maxval=255.0)
    # Paint white background regions (channel 0 == 255 drives the mask).
    imgs = imgs.at[:, :, :8, :32].set(255.0)

    out = custom_color_jitter_batch(imgs, k_fac_b, brightness=0.5)
    out = jax.block_until_ready(out)

    factors = jax.random.uniform(k_fac_b, (B,), dtype=jnp.float32,
                                 minval=0.5, maxval=1.5)
    ref = _reference(imgs, factors)
    assert out.shape == imgs.shape and out.dtype == imgs.dtype
    assert jnp.allclose(out, ref, atol=1e-5), "batched mismatch vs. reference"
    assert jnp.all(out[:, :, :8, :32] == 255.0), "background not preserved"

    # ---- single-image case: non-8-multiple H and non-128-multiple W ----
    C2, H2, W2 = 3, 20, 224
    img1 = jax.random.uniform(jax.random.PRNGKey(7), (C2, H2, W2),
                              dtype=jnp.float32, minval=0.0, maxval=255.0)
    img1 = img1.at[:, :5, 200:].set(255.0)

    out1 = custom_color_jitter(img1, k_fac_s, brightness=0.5)
    out1 = jax.block_until_ready(out1)

    factor1 = jax.random.uniform(k_fac_s, (1,), dtype=jnp.float32,
                                 minval=0.5, maxval=1.5)
    ref1 = _reference(img1[None], factor1)[0]
    assert out1.shape == img1.shape and out1.dtype == img1.dtype
    assert jnp.allclose(out1, ref1, atol=1e-5), "single-image mismatch vs. reference"
    assert jnp.all(out1[:, :5, 200:] == 255.0), "background not preserved"

    print("KERNEL_OK")
</pallas_src>

<mosaic_0001>
module attributes {stable_mosaic.version = 11 : i64} {
  func.func @_color_jitter_kernel(%arg0: i32, %arg1: i32, %arg2: memref<2xf32, #tpu.memory_space<smem>>, %arg3: memref<1x3x32x224xf32, #tpu.memory_space<vmem>>, %arg4: memref<1x3x32x224xf32, #tpu.memory_space<vmem>>) attributes {dimension_semantics = [#tpu.dimension_semantics<parallel>, #tpu.dimension_semantics<parallel>], iteration_bounds = array<i64: 2, 1>, scalar_prefetch = 1 : i64, scratch_operands = 0 : i64, tpu.core_type = #tpu.core_type<tc>, window_params = [{transform_indices = @transform_0, window_bounds = array<i64: 1, 3, 32, 224>}, {transform_indices = @transform_1, window_bounds = array<i64: 1, 3, 32, 224>}]} {
    %0 = arith.index_cast %arg0 : i32 to index
    %1 = memref.load %arg2[%0] : memref<2xf32, #tpu.memory_space<smem>>
    %c0 = arith.constant 0 : index
    %c0_0 = arith.constant 0 : index
    %c0_1 = arith.constant 0 : index
    %c0_2 = arith.constant 0 : index
    %2 = vector.load %arg3[%c0, %c0_0, %c0_1, %c0_2] : memref<1x3x32x224xf32, #tpu.memory_space<vmem>>, vector<1x3x32x224xf32>
    %3 = vector.shape_cast %2 : vector<1x3x32x224xf32> to vector<3x32x224xf32>
    %4 = vector.broadcast %1 : f32 to vector<3x32x224xf32>
    %5 = arith.mulf %3, %4 : vector<3x32x224xf32>
    %cst = arith.constant 2.550000e+02 : f32
    %6 = vector.broadcast %cst : f32 to vector<3x32x224xf32>
    %7 = arith.minimumf %5, %6 : vector<3x32x224xf32>
    %8 = vector.extract_strided_slice %3 {offsets = [0, 0, 0], sizes = [1, 32, 224], strides = [1, 1, 1]} : vector<3x32x224xf32> to vector<1x32x224xf32>
    %cst_3 = arith.constant 2.550000e+02 : f32
    %9 = vector.broadcast %cst_3 : f32 to vector<1x32x224xf32>
    %10 = arith.cmpf oeq, %8, %9 : vector<1x32x224xf32>
    %cst_4 = arith.constant 2.550000e+02 : f32
    %11 = vector.shape_cast %10 : vector<1x32x224xi1> to vector<1x32x224xi1>
    %12 = vector.broadcast %11 : vector<1x32x224xi1> to vector<3x32x224xi1>
    %13 = vector.broadcast %cst_4 : f32 to vector<3x32x224xf32>
    %14 = arith.select %12, %13, %7 : vector<3x32x224xi1>, vector<3x32x224xf32>
    %c0_5 = arith.constant 0 : index
    %c0_6 = arith.constant 0 : index
    %c0_7 = arith.constant 0 : index
    %c0_8 = arith.constant 0 : index
    %15 = vector.load %arg4[%c0_5, %c0_6, %c0_7, %c0_8] : memref<1x3x32x224xf32, #tpu.memory_space<vmem>>, vector<1x3x32x224xf32>
    %16 = vector.shape_cast %15 : vector<1x3x32x224xf32> to vector<3x32x224xf32>
    %17 = vector.shape_cast %14 : vector<3x32x224xf32> to vector<1x3x32x224xf32>
    tpu.vector_store %arg4[%c0_5, %c0_6, %c0_7, %c0_8], %17 {strides = array<i32>} : memref<1x3x32x224xf32, #tpu.memory_space<vmem>>, vector<1x3x32x224xf32>,
    return
  }
  func.func @transform_0(%arg0: i32, %arg1: i32, %arg2: memref<2xf32, #tpu.memory_space<smem>>) -> (i32, i32, i32, i32) {
    %c0_i32 = arith.constant 0 : i32
    %c0_i32_0 = arith.constant 0 : i32
    %c0_i32_1 = arith.constant 0 : i32
    return %arg0, %c0_i32, %arg1, %c0_i32_0 : i32, i32, i32, i32
  }
  func.func @transform_1(%arg0: i32, %arg1: i32, %arg2: memref<2xf32, #tpu.memory_space<smem>>) -> (i32, i32, i32, i32) {
    %c0_i32 = arith.constant 0 : i32
    %c0_i32_0 = arith.constant 0 : i32
    %c0_i32_1 = arith.constant 0 : i32
    return %arg0, %c0_i32, %arg1, %c0_i32_0 : i32, i32, i32, i32
  }
}

</mosaic_0001>

<llo_original>
// kernel: tpu_custom_call.1
$region0: #{tpu_custom_call.1}
  #allocation0 [shape = 'u32[]', space=smem, size = 0x4, offset = 0x4, fixed_abs, tag = 'smem constant byte address 0x4 - core index']
  #allocation1 [shape = 'u32[144,128]{1,0:T(1,128)}', space=vmem, size = 0x12000, scoped, tag = 'internal scratch']
  #allocation2 [shape = 's32[1]{0}', space=sflag, size = 0x4, scoped, tag = 'scoped memory for tpu_custom_call.1']
  #allocation3 [shape = 'u8[512]{0}', space=smem, size = 0x200, scoped, tag = 'prefetched SMEM operand 0']
  %s0 = inlined_call_operand.hbm [shape: f32[2], index: 0, kind: input, shape index: {}]
  %s1 = inlined_call_operand.hbm [shape: f32[2,3,32,224], index: 1, kind: input, shape index: {}]
  %s2 = inlined_call_operand.hbm [shape: f32[2,3,32,224], index: 2, kind: output, shape index: {}]
  %s3 = sld [smem:[#allocation0]]
  $region41: #{tpu_custom_call.1} parent=0
    _
  %s5 = ssub.s32 1, %s3
  %s6 = scalar_select 0, %s5, %s3
  %8 = dma.hbm_to_smem %s0, 16, [#allocation3], [#allocation2]
  %9 = dma.done [#allocation2], 16
  %10 = sfence
  $region1: #{tpu_custom_call.1} parent=0
    #allocation4 [shape = 'u8[196608]{0}', space=vmem, size = 0x30000, scoped, tag = 'input window, operand 1']
    #allocation5 [shape = 's32[2]{0}', space=sflag, size = 0x8, scoped, tag = 'scoped memory for tpu_custom_call.1']
    #allocation6 [shape = 's32[2]{0}', space=sflag, size = 0x8, scoped, tag = 'scoped memory for tpu_custom_call.1']
    #allocation7 [shape = 'u8[196608]{0}', space=vmem, size = 0x30000, scoped, tag = 'output window, operand 0']
    %11 = vsyncpa [#allocation5], 0
    %s12 = scalar_lea.sflag [#allocation5], 1
    %13 = vsyncpa %s12, 0
    %14 = vsyncpa [#allocation6], 0
    %s15 = scalar_lea.sflag [#allocation6], 1
    %16 = vsyncpa %s15, 0
    loop: start=0, step=1, limit=4
    $region2: #{tpu_custom_call.1} parent=1 // loop_pre_header
      _
    $region3: #{tpu_custom_call.1} parent=1 // loop_header
      %s18 = sphi 0, %s22
      %p19 = scmp.ge.s32.totalorder %s18, 4
      %s25 = sphi 0, %s37
      %s26 = sphi 0, %s33
      %s27 = sphi 0, %s25
      %s28 = sphi 0, %s26
      %s29 = sphi 0, %s27
      %s30 = sphi 0, %s28
      %s42 = sphi 0, %s44
      %s45 = sphi 0, %s42
      %s46 = sphi 0, %s45
      %s62 = sphi 0, %s46
      %s70 = sphi 0, %s72
      %s73 = sphi 0, %s70
      %s74 = sphi 0, %s73
      %s90 = sphi 0, %s74
    $region4: #{tpu_custom_call.1} parent=1 // loop_header_branch
      %21 = sbr.rel (%p19) target = $region8
    $region5: #{tpu_custom_call.1} parent=1 // loop_body
      %s23 = ssub.s32 %s18, 1
      %s24 = ssub.s32 %s18, 2
      %s31 = sadd.s32 1, %s26
      %p32 = scmp.ge.s32.totalorder %s31, 1
      %s33 = scalar_select %p32, 0, %s31
      %s34 = sadd.s32 1, %s25
      %s35 = scalar_select %p32, %s34, %s25
      %p36 = scmp.ge.s32.totalorder %s35, 2
      %s37 = scalar_select %p36, 0, %s35
      %s38 = ssub.s32 %s25, %s37
      %s39 = ssub.s32 %s26, %s33
      %s40 = sor.u32 %s38, %s39
      %p41 = scmp.eq.s32.totalorder %s40, 0
      %s43 = sadd.s32 %s42, 1
      %s44 = scalar_select %p41, %s42, %s43
      %p47 = pneg %p41
      %p48 = scmp.eq.s32.totalorder %s18, 1
      %p49 = por %p47, %p48
      %p50 = scmp.ne.s32.totalorder %s42, %s45
      %p51 = scmp.eq.s32.totalorder %s18, 0
      %p52 = por %p50, %p51
      %p53 = scmp.ne.s32.totalorder %s42, %s45
      %p54 = scmp.eq.s32.totalorder %s23, 1
      %p55 = por %p53, %p54
      %p56 = scmp.ne.s32.totalorder %s45, %s46
      %p57 = scmp.eq.s32.totalorder %s23, 0
      %p58 = por %p56, %p57
      %p59 = scmp.ne.s32.totalorder %s45, %s46
      %p60 = scmp.eq.s32.totalorder %s24, 1
      %p61 = por %p59, %p60
      %p63 = scmp.ne.s32.totalorder %s46, %s62
      %p64 = scmp.eq.s32.totalorder %s24, 0
      %p65 = por %p63, %p64
      %s66 = ssub.s32 %s25, %s37
      %s67 = ssub.s32 %s26, %s33
      %s68 = sor.u32 %s66, %s67
      %p69 = scmp.eq.s32.totalorder %s68, 0
      %s71 = sadd.s32 %s70, 1
      %s72 = scalar_select %p69, %s70, %s71
      %p75 = pneg %p69
      %p76 = scmp.eq.s32.totalorder %s18, 1
      %p77 = por %p75, %p76
      %p78 = scmp.ne.s32.totalorder %s70, %s73
      %p79 = scmp.eq.s32.totalorder %s18, 0
      %p80 = por %p78, %p79
      %p81 = scmp.ne.s32.totalorder %s70, %s73
      %p82 = scmp.eq.s32.totalorder %s23, 1
      %p83 = por %p81, %p82
      %p84 = scmp.ne.s32.totalorder %s73, %s74
      %p85 = scmp.eq.s32.totalorder %s23, 0
      %p86 = por %p84, %p85
      %p87 = scmp.ne.s32.totalorder %s73, %s74
      %p88 = scmp.eq.s32.totalorder %s24, 1
      %p89 = por %p87, %p88
      %p91 = scmp.ne.s32.totalorder %s74, %s90
      %p92 = scmp.eq.s32.totalorder %s24, 0
      %p93 = por %p91, %p92
      %p94 = scmp.le.s32.totalorder 1, %s18
      %p95 = scmp.lt.s32.totalorder %s18, 3
      %p96 = pnand %p94, %p95
      %p97 = pneg %p96
      // Predicated region
      $region9: #{tpu_custom_call.1} parent=5 // pred_check
        _
      $region10: #{tpu_custom_call.1} parent=5 // pred_check_branch
        %99 = sbr.rel (%p96) target = $region12
      $region11: #{tpu_custom_call.1} parent=5 // pred_region
        %s100 = ssub.s32 %s18, 1
      $region12: #{tpu_custom_call.1} parent=5 // pred_fallthru
        _
      %p101 = scmp.lt.s32.totalorder %s18, 2
      // Predicated region
      $region13: #{tpu_custom_call.1} parent=5 // pred_check
        %p102 = pneg %p101
      $region14: #{tpu_custom_call.1} parent=5 // pred_check_branch
        %104 = sbr.rel (%p102) target = $region16
      $region15: #{tpu_custom_call.1} parent=5 // pred_region
        // Predicated region
        $region17: #{tpu_custom_call.1} parent=15 // pred_check
          %p105 = pneg %p52
        $region18: #{tpu_custom_call.1} parent=15 // pred_check_branch
          %107 = sbr.rel (%p105) target = $region20
        $region19: #{tpu_custom_call.1} parent=15 // pred_region
          %s108 = sand.u32 %s42, 1
          %s109 = scalar_lea.sflag [#allocation5], %s108
          %s110 = sand.u32 %s42, 1
          %s111 = smul.addr %s110, 192
          %s112 = scalar_lea.vmem [#allocation4], %s111
          %s113 = smul.u32 4, %s26
          %s115 = ssub.s32 3072, 3072
          %116 = vsyncadd %s109, %s115
          %s117 = smul.addr %s113, 2
          %s118 = smul.addr %s25, 24
          %s119 = sadd.s32 %s117, %s118
          %s120 = smul.addr %s119, 128
          %s121 = scalar_lea.hbm %s1, %s120
          %s122 = sshll.u32 %s112, 4
          %s123 = int_to_ptr.vmem [resolvable:$true] %s122
          %128 = dma.hbm_to_vmem [thread:$0]  %s121, 3072, %s123, %s109, 256, 256, 16
        $region20: #{tpu_custom_call.1} parent=15 // pred_fallthru
          _
      $region16: #{tpu_custom_call.1} parent=5 // pred_fallthru
        _
      %p129 = scmp.le.s32.totalorder 1, %s18
      %p130 = scmp.lt.s32.totalorder %s18, 3
      %p131 = pnand %p129, %p130
      %p132 = pneg %p131
      // Predicated region
      $region21: #{tpu_custom_call.1} parent=5 // pred_check
        _
      $region22: #{tpu_custom_call.1} parent=5 // pred_check_branch
        %134 = sbr.rel (%p131) target = $region24
      $region23: #{tpu_custom_call.1} parent=5 // pred_region
        %s135 = ssub.s32 %s18, 1
        %s136 = sand.u32 %s45, 1
        %s137 = scalar_lea.sflag [#allocation5], %s136
        %s138 = sand.u32 %s45, 1
        %s139 = smul.addr %s138, 192
        %s140 = scalar_lea.vmem [#allocation4], %s139
        // Predicated region
        $region25: #{tpu_custom_call.1} parent=23 // pred_check
          %p141 = pneg %p58
        $region26: #{tpu_custom_call.1} parent=23 // pred_check_branch
          %143 = sbr.rel (%p141) target = $region28
        $region27: #{tpu_custom_call.1} parent=23 // pred_region
          %144 = dma.done %s137, 3072
        $region28: #{tpu_custom_call.1} parent=23 // pred_fallthru
          _
        %s145 = sand.u32 %s45, 1
        %s146 = scalar_lea.sflag [#allocation5], %s145
        %s147 = sand.u32 %s45, 1
        %s148 = smul.addr %s147, 192
        %s149 = scalar_lea.vmem [#allocation4], %s148
        %p150 = pneg %p58
        %p151 = pneg %p55
        %p152 = pneg %p86
        %p153 = pneg %p83
        %s154 = sand.u32 %s73, 1
        %s155 = scalar_lea.sflag [#allocation6], %s154
        %s156 = sand.u32 %s73, 1
        %s157 = smul.addr %s156, 192
        %s158 = scalar_lea.vmem [#allocation7], %s157
        %s159 = smul.u32 4, %s28
        %s160 = smul.u32 4, %s28
        %s161 = sld [smem:[#allocation3 + %s27]]
        %v162 = vld [vmem:[%s140] sm:$0xff]
        %v163 = vld [vmem:[%s140 + $0x8] sm:$0xff]
        %v164 = vld [vmem:[%s140 + $0x10] sm:$0xff]
        %v165 = vld [vmem:[%s140 + $0x18] sm:$0xff]
        %v166 = vld [vmem:[%s140 + $0x20] sm:$0xff]
        %v167 = vld [vmem:[%s140 + $0x28] sm:$0xff]
        %v168 = vld [vmem:[%s140 + $0x30] sm:$0xff]
        %v169 = vld [vmem:[%s140 + $0x38] sm:$0xff]
        %v170 = vld [vmem:[%s140 + $0x40] sm:$0xff]
        %v171 = vld [vmem:[%s140 + $0x48] sm:$0xff]
        %v172 = vld [vmem:[%s140 + $0x50] sm:$0xff]
        %v173 = vld [vmem:[%s140 + $0x58] sm:$0xff]
        %v174 = vld [vmem:[%s140 + $0x60] sm:$0xff]
        %v175 = vld [vmem:[%s140 + $0x68] sm:$0xff]
        %v176 = vld [vmem:[%s140 + $0x70] sm:$0xff]
        %v177 = vld [vmem:[%s140 + $0x78] sm:$0xff]
        %v178 = vld [vmem:[%s140 + $0x80] sm:$0xff]
        %v179 = vld [vmem:[%s140 + $0x88] sm:$0xff]
        %v180 = vld [vmem:[%s140 + $0x90] sm:$0xff]
        %v181 = vld [vmem:[%s140 + $0x98] sm:$0xff]
        %v182 = vld [vmem:[%s140 + $0xa0] sm:$0xff]
        %v183 = vld [vmem:[%s140 + $0xa8] sm:$0xff]
        %v184 = vld [vmem:[%s140 + $0xb0] sm:$0xff]
        %v185 = vld [vmem:[%s140 + $0xb8] sm:$0xff]
        %v186 = vstv %s161
        %v187 = vmul.f32 %v162, %v186
        %v188 = vmul.f32 %v163, %v186
        %v189 = vmul.f32 %v164, %v186
        %v190 = vmul.f32 %v165, %v186
        %v191 = vmul.f32 %v166, %v186
        %v192 = vmul.f32 %v167, %v186
        %v193 = vmul.f32 %v168, %v186
        %v194 = vmul.f32 %v169, %v186
        %v195 = vmul.f32 %v170, %v186
        %v196 = vmul.f32 %v171, %v186
        %v197 = vmul.f32 %v172, %v186
        %v198 = vmul.f32 %v173, %v186
        %v199 = vmul.f32 %v174, %v186
        %v200 = vmul.f32 %v175, %v186
        %v201 = vmul.f32 %v176, %v186
        %v202 = vmul.f32 %v177, %v186
        %v203 = vmul.f32 %v178, %v186
        %v204 = vmul.f32 %v179, %v186
        %v205 = vmul.f32 %v180, %v186
        %v206 = vmul.f32 %v181, %v186
        %v207 = vmul.f32 %v182, %v186
        %v208 = vmul.f32 %v183, %v186
        %v209 = vmul.f32 %v184, %v186
        %v210 = vmul.f32 %v185, %v186
        %v211 = vmin.f32 %v187, 255.0
        %v212 = vmin.f32 %v188, 255.0
        %v213 = vmin.f32 %v189, 255.0
        %v214 = vmin.f32 %v190, 255.0
        %v215 = vmin.f32 %v191, 255.0
        %v216 = vmin.f32 %v192, 255.0
        %v217 = vmin.f32 %v193, 255.0
        %v218 = vmin.f32 %v194, 255.0
        %v219 = vmin.f32 %v195, 255.0
        %v220 = vmin.f32 %v196, 255.0
        %v221 = vmin.f32 %v197, 255.0
        %v222 = vmin.f32 %v198, 255.0
        %v223 = vmin.f32 %v199, 255.0
        %v224 = vmin.f32 %v200, 255.0
        %v225 = vmin.f32 %v201, 255.0
        %v226 = vmin.f32 %v202, 255.0
        %v227 = vmin.f32 %v203, 255.0
        %v228 = vmin.f32 %v204, 255.0
        %v229 = vmin.f32 %v205, 255.0
        %v230 = vmin.f32 %v206, 255.0
        %v231 = vmin.f32 %v207, 255.0
        %v232 = vmin.f32 %v208, 255.0
        %v233 = vmin.f32 %v209, 255.0
        %v234 = vmin.f32 %v210, 255.0
        %vm235 = vcmp.eq.f32.partialorder %v162, 255.0
        %vm236 = vcmp.eq.f32.partialorder %v163, 255.0
        %vm237 = vcmp.eq.f32.partialorder %v164, 255.0
        %vm238 = vcmp.eq.f32.partialorder %v165, 255.0
        %vm239 = vcmp.eq.f32.partialorder %v166, 255.0
        %vm240 = vcmp.eq.f32.partialorder %v167, 255.0
        %vm241 = vcmp.eq.f32.partialorder %v168, 255.0
        %vm242 = vcmp.eq.f32.partialorder %v169, 255.0
        %v243 = vsel %vm235, 1, 0
        %v244 = vsel %vm236, 1, 0
        %v245 = vsel %vm237, 1, 0
        %v246 = vsel %vm238, 1, 0
        %v247 = vsel %vm239, 1, 0
        %v248 = vsel %vm240, 1, 0
        %v249 = vsel %vm241, 1, 0
        %v250 = vsel %vm242, 1, 0
        %vm251 = vcmp.eq.s32.totalorder %v243, 1
        %vm252 = vcmp.eq.s32.totalorder %v244, 1
        %vm253 = vcmp.eq.s32.totalorder %v245, 1
        %vm254 = vcmp.eq.s32.totalorder %v246, 1
        %vm255 = vcmp.eq.s32.totalorder %v247, 1
        %vm256 = vcmp.eq.s32.totalorder %v248, 1
        %vm257 = vcmp.eq.s32.totalorder %v249, 1
        %vm258 = vcmp.eq.s32.totalorder %v250, 1
        %v259 = vsel %vm251, 255.0, %v211
        %v260 = vsel %vm252, 255.0, %v212
        %v261 = vsel %vm253, 255.0, %v213
        %v262 = vsel %vm254, 255.0, %v214
        %v263 = vsel %vm255, 255.0, %v215
        %v264 = vsel %vm256, 255.0, %v216
        %v265 = vsel %vm257, 255.0, %v217
        %v266 = vsel %vm258, 255.0, %v218
        %v267 = vsel %vm251, 255.0, %v219
        %v268 = vsel %vm252, 255.0, %v220
        %v269 = vsel %vm253, 255.0, %v221
        %v270 = vsel %vm254, 255.0, %v222
        %v271 = vsel %vm255, 255.0, %v223
        %v272 = vsel %vm256, 255.0, %v224
        %v273 = vsel %vm257, 255.0, %v225
        %v274 = vsel %vm258, 255.0, %v226
        %v275 = vsel %vm251, 255.0, %v227
        %v276 = vsel %vm252, 255.0, %v228
        %v277 = vsel %vm253, 255.0, %v229
        %v278 = vsel %vm254, 255.0, %v230
        %v279 = vsel %vm255, 255.0, %v231
        %v280 = vsel %vm256, 255.0, %v232
        %v281 = vsel %vm257, 255.0, %v233
        %v282 = vsel %vm258, 255.0, %v234
        %283 = vst [vmem:[%s158] sm:$0xff] %v259
        %vm284 = vcmask 785408
        %285 = vst.msk [vmem:[%s158 + $0x8] sm:$0xff] %vm284, %v260
        %286 = vst [vmem:[%s158 + $0x10] sm:$0xff] %v261
        %287 = vst.msk [vmem:[%s158 + $0x18] sm:$0xff] %vm284, %v262
        %288 = vst [vmem:[%s158 + $0x20] sm:$0xff] %v263
        %289 = vst.msk [vmem:[%s158 + $0x28] sm:$0xff] %vm284, %v264
        %290 = vst [vmem:[%s158 + $0x30] sm:$0xff] %v265
        %291 = vst.msk [vmem:[%s158 + $0x38] sm:$0xff] %vm284, %v266
        %292 = vst [vmem:[%s158 + $0x40] sm:$0xff] %v267
        %293 = vst.msk [vmem:[%s158 + $0x48] sm:$0xff] %vm284, %v268
        %294 = vst [vmem:[%s158 + $0x50] sm:$0xff] %v269
        %295 = vst.msk [vmem:[%s158 + $0x58] sm:$0xff] %vm284, %v270
        %296 = vst [vmem:[%s158 + $0x60] sm:$0xff] %v271
        %297 = vst.msk [vmem:[%s158 + $0x68] sm:$0xff] %vm284, %v272
        %298 = vst [vmem:[%s158 + $0x70] sm:$0xff] %v273
        %299 = vst.msk [vmem:[%s158 + $0x78] sm:$0xff] %vm284, %v274
        %300 = vst [vmem:[%s158 + $0x80] sm:$0xff] %v275
        %301 = vst.msk [vmem:[%s158 + $0x88] sm:$0xff] %vm284, %v276
        %302 = vst [vmem:[%s158 + $0x90] sm:$0xff] %v277
        %303 = vst.msk [vmem:[%s158 + $0x98] sm:$0xff] %vm284, %v278
        %304 = vst [vmem:[%s158 + $0xa0] sm:$0xff] %v279
        %305 = vst.msk [vmem:[%s158 + $0xa8] sm:$0xff] %vm284, %v280
        %306 = vst [vmem:[%s158 + $0xb0] sm:$0xff] %v281
        %307 = vst.msk [vmem:[%s158 + $0xb8] sm:$0xff] %vm284, %v282
        %s308 = sand.u32 %s73, 1
        %s309 = scalar_lea.sflag [#allocation6], %s308
        %s310 = sand.u32 %s73, 1
        %s311 = smul.addr %s310, 192
        %s312 = scalar_lea.vmem [#allocation7], %s311
        // Predicated region
        $region29: #{tpu_custom_call.1} parent=23 // pred_check
          %p313 = pneg %p83
        $region30: #{tpu_custom_call.1} parent=23 // pred_check_branch
          %315 = sbr.rel (%p313) target = $region32
        $region31: #{tpu_custom_call.1} parent=23 // pred_region
          %s316 = smul.u32 4, %s28
          %s318 = ssub.s32 3072, 3072
          %319 = vsyncadd %s309, %s318
          %s320 = smul.addr %s316, 2
          %s321 = smul.addr %s27, 24
          %s322 = sadd.s32 %s320, %s321
          %s323 = smul.addr %s322, 128
          %s324 = scalar_lea.hbm %s2, %s323
          %s325 = sshll.u32 %s312, 4
          %s326 = int_to_ptr.vmem [resolvable:$true] %s325
          %331 = dma.vmem_to_hbm [thread:$0]  %s326, 3072, %s324, %s309, 256, 256, 16
        $region32: #{tpu_custom_call.1} parent=23 // pred_fallthru
          _
      $region24: #{tpu_custom_call.1} parent=5 // pred_fallthru
        _
      %p332 = scmp.le.s32.totalorder 2, %s18
      // Predicated region
      $region33: #{tpu_custom_call.1} parent=5 // pred_check
        %p333 = pneg %p332
      $region34: #{tpu_custom_call.1} parent=5 // pred_check_branch
        %335 = sbr.rel (%p333) target = $region36
      $region35: #{tpu_custom_call.1} parent=5 // pred_region
        %s336 = ssub.s32 %s18, 2
        // Predicated region
        $region37: #{tpu_custom_call.1} parent=35 // pred_check
          %p337 = pneg %p89
        $region38: #{tpu_custom_call.1} parent=35 // pred_check_branch
          %339 = sbr.rel (%p337) target = $region40
        $region39: #{tpu_custom_call.1} parent=35 // pred_region
          %s340 = sand.u32 %s74, 1
          %s341 = scalar_lea.sflag [#allocation6], %s340
          %s342 = sand.u32 %s74, 1
          %s343 = smul.addr %s342, 192
          %s344 = scalar_lea.vmem [#allocation7], %s343
          %345 = dma.done %s341, 3072
        $region40: #{tpu_custom_call.1} parent=35 // pred_fallthru
          _
      $region36: #{tpu_custom_call.1} parent=5 // pred_fallthru
        _
    $region6: #{tpu_custom_call.1} parent=1 // loop_footer
      %s22 = sadd.s32 1, %s18
    $region7: #{tpu_custom_call.1} parent=1 // loop_footer_branch
      %17 = sbr.rel target = $region3
    $region8: #{tpu_custom_call.1} parent=1 // loop_exit
      _
    %346 = vsyncpa [#allocation5], 1
    %s347 = scalar_lea.sflag [#allocation5], 1
    %348 = vsyncpa %s347, 1
    %349 = vsyncpa [#allocation6], 1
    %s350 = scalar_lea.sflag [#allocation6], 1
    %351 = vsyncpa %s350, 1

</llo_original>
